<compile_context>
chip_gen: v7x
topology: tpu7x:2x2x1
jax: 0.10.0
libtpu: 0.0.40
codegen_flags: <defaults>
</compile_context>

<pallas_src>
import jax
import jax.numpy as jnp
from jax.experimental import pallas as pl
from jax.experimental.pallas import tpu as pltpu

_LANE = 128
_MAX_BATCH_TILE = 1024


def _round_up(n, m):
    return ((n + m - 1) // m) * m


def _netb_kernel(x_ref, y_ref,
                 w1x_ref, w1y_ref, b1_ref,
                 w2_ref, b2_ref,
                 w3_ref, b3_ref,
                 out_ref):
    # cat(x, y) @ W1 == x @ W1[:d1] + y @ W1[d1:]  (concat fused away).
    xb = x_ref[...].astype(jnp.bfloat16)
    yb = y_ref[...].astype(jnp.bfloat16)
    h1 = (jnp.dot(xb, w1x_ref[...], preferred_element_type=jnp.float32)
          + jnp.dot(yb, w1y_ref[...], preferred_element_type=jnp.float32)
          + b1_ref[...])
    h1 = jnp.maximum(h1, 0.0)

    h2 = (jnp.dot(h1.astype(jnp.bfloat16), w2_ref[...],
                  preferred_element_type=jnp.float32)
          + b2_ref[...])
    h2 = jnp.maximum(h2, 0.0)

    # fc3 has out_features == 1: VPU multiply + XLU lane reduction (f32)
    # instead of an MXU pass producing a single output column.
    o = jnp.sum(h2 * w3_ref[...], axis=-1, keepdims=True) + b3_ref[...]
    out_ref[...] = o.astype(out_ref.dtype)


def init_netb_params(key, input_size1=32, input_size2=32,
                     hidden_size1=100, hidden_size2=100):
    """Matches nn.init.normal_(std=0.02) weights / zero biases.
    Weights returned transposed: [in_features, out_features]."""
    k1, k2, k3 = jax.random.split(key, 3)
    din = input_size1 + input_size2

    def lin(k, fin, fout):
        w = 0.02 * jax.random.normal(k, (fin, fout), dtype=jnp.float32)
        b = jnp.zeros((fout,), dtype=jnp.float32)
        return (w, b)

    return (lin(k1, din, hidden_size1),
            lin(k2, hidden_size1, hidden_size2),
            lin(k3, hidden_size2, 1))


def prepare_netb_params(params, input_size1):
    """One-time preprocessing: split fc1 weight by input, pad hidden dims to
    128 lanes, cast MXU weights to bf16 (accumulation stays f32 in-kernel)."""
    (w1, b1), (w2, b2), (w3, b3) = params      # w: [in, out], b: [out]
    din, h1 = w1.shape
    h2 = w2.shape[1]
    h1p = _round_up(h1, _LANE)
    h2p = _round_up(h2, _LANE)

    def pad2(w, rows, cols):
        r, c = w.shape
        return jnp.pad(w, ((0, rows - r), (0, cols - c)))

    w1x = pad2(w1[:input_size1], input_size1, h1p).astype(jnp.bfloat16)
    w1y = pad2(w1[input_size1:], din - input_size1, h1p).astype(jnp.bfloat16)
    w2p = pad2(w2, h1p, h2p).astype(jnp.bfloat16)
    # fc3 weight as an f32 row of width h2p (consumed on the VPU, not MXU).
    w3r = pad2(w3.reshape(h2, 1).T, 1, h2p).astype(jnp.float32)

    b1p = jnp.pad(b1, (0, h1p - h1)).reshape(1, h1p).astype(jnp.float32)
    b2p = jnp.pad(b2, (0, h2p - h2)).reshape(1, h2p).astype(jnp.float32)
    b3p = b3.reshape(1, 1).astype(jnp.float32)
    return (w1x, w1y, b1p, w2p, b2p, w3r, b3p)


def _pick_batch_tile(B):
    """Largest sublane-aligned (multiple-of-8) tile, capped so VMEM stays
    comfortably below the scoped limit and per-step overhead is amortized."""
    return min(_MAX_BATCH_TILE, _round_up(B, 8))


def netb_forward(x, y, prepped):
    """NetB.forward: relu(fc1(cat(x,y))) -> relu(fc2) -> fc3."""
    w1x, w1y, b1, w2, b2, w3, b3 = prepped
    B, d1 = x.shape
    d2 = y.shape[1]
    h1p = w1x.shape[1]
    h2p = w2.shape[1]

    bm = _pick_batch_tile(B)
    B_pad = _round_up(B, bm)
    if B_pad != B:
        x = jnp.pad(x, ((0, B_pad - B), (0, 0)))
        y = jnp.pad(y, ((0, B_pad - B), (0, 0)))
    nb = B_pad // bm

    const = lambda shape: pl.BlockSpec(shape, lambda i: (0, 0))
    batched = lambda shape: pl.BlockSpec(shape, lambda i: (i, 0))

    flops = 2 * B_pad * (d1 * h1p + d2 * h1p + h1p * h2p + h2p)
    bytes_accessed = (4 * (x.size + y.size + B_pad)             # acts in/out (f32)
                      + 2 * (w1x.size + w1y.size + w2.size)     # bf16 weights
                      + 4 * (b1.size + b2.size + w3.size + b3.size))

    out = pl.pallas_call(
        _netb_kernel,
        out_shape=jax.ShapeDtypeStruct((B_pad, 1), jnp.float32),
        grid=(nb,),
        in_specs=[
            batched((bm, d1)), batched((bm, d2)),
            const((d1, h1p)), const((d2, h1p)), const((1, h1p)),
            const((h1p, h2p)), const((1, h2p)),
            const((1, h2p)), const((1, 1)),
        ],
        out_specs=batched((bm, 1)),
        compiler_params=pltpu.CompilerParams(
            dimension_semantics=("parallel",)),
        cost_estimate=pl.CostEstimate(
            flops=flops, transcendentals=0, bytes_accessed=bytes_accessed),
    )(x, y, w1x, w1y, b1, w2, b2, w3, b3)

    if B_pad != B:
        out = out[:B]
    return out


if __name__ == "__main__":
    key = jax.random.PRNGKey(0)
    kx, ky, kp = jax.random.split(key, 3)

    B = 8
    input_size1 = 32
    input_size2 = 32

    x = jax.random.normal(kx, (B, input_size1), dtype=jnp.float32)
    y = jax.random.normal(ky, (B, input_size2), dtype=jnp.float32)

    params = init_netb_params(kp, input_size1, input_size2)
    prepped = prepare_netb_params(params, input_size1)

    out = netb_forward(x, y, prepped)
    jax.block_until_ready(out)

    # Plain-JAX f32 reference (exact NetB.forward semantics).
    (w1, b1), (w2, b2), (w3, b3) = params
    inp = jnp.concatenate([x, y], axis=1)
    h = jnp.maximum(inp @ w1 + b1, 0.0)
    h = jnp.maximum(h @ w2 + b2, 0.0)
    ref = h @ w3 + b3

    assert out.shape == (B, 1)
    # bf16 matmul inputs with f32 accumulation -> slightly looser tolerance.
    assert jnp.allclose(out, ref, atol=1e-3, rtol=1e-2), \
        float(jnp.max(jnp.abs(out - ref)))

    print("KERNEL_OK")
</pallas_src>

<mosaic_0001>
module attributes {stable_mosaic.version = 11 : i64} {
  func.func @_netb_kernel(%arg0: i32, %arg1: memref<8x32xf32, #tpu.memory_space<vmem>>, %arg2: memref<8x32xf32, #tpu.memory_space<vmem>>, %arg3: memref<32x128xbf16, #tpu.memory_space<vmem>>, %arg4: memref<32x128xbf16, #tpu.memory_space<vmem>>, %arg5: memref<1x128xf32, #tpu.memory_space<vmem>>, %arg6: memref<128x128xbf16, #tpu.memory_space<vmem>>, %arg7: memref<1x128xf32, #tpu.memory_space<vmem>>, %arg8: memref<1x128xf32, #tpu.memory_space<vmem>>, %arg9: memref<1x1xf32, #tpu.memory_space<vmem>>, %arg10: memref<8x1xf32, #tpu.memory_space<vmem>>) attributes {dimension_semantics = [#tpu.dimension_semantics<parallel>], iteration_bounds = array<i64: 1>, scalar_prefetch = 0 : i64, scratch_operands = 0 : i64, tpu.core_type = #tpu.core_type<tc>, window_params = [{transform_indices = @transform_0, window_bounds = array<i64: 8, 32>}, {transform_indices = @transform_1, window_bounds = array<i64: 8, 32>}, {pipeline_mode = #tpu.pipeline_mode<synchronous>, transform_indices = @transform_2, window_bounds = array<i64: 32, 128>}, {pipeline_mode = #tpu.pipeline_mode<synchronous>, transform_indices = @transform_3, window_bounds = array<i64: 32, 128>}, {pipeline_mode = #tpu.pipeline_mode<synchronous>, transform_indices = @transform_4, window_bounds = array<i64: 1, 128>}, {pipeline_mode = #tpu.pipeline_mode<synchronous>, transform_indices = @transform_5, window_bounds = array<i64: 128, 128>}, {pipeline_mode = #tpu.pipeline_mode<synchronous>, transform_indices = @transform_6, window_bounds = array<i64: 1, 128>}, {pipeline_mode = #tpu.pipeline_mode<synchronous>, transform_indices = @transform_7, window_bounds = array<i64: 1, 128>}, {pipeline_mode = #tpu.pipeline_mode<synchronous>, transform_indices = @transform_8, window_bounds = array<i64: 1, 1>}, {transform_indices = @transform_9, window_bounds = array<i64: 8, 1>}]} {
    %c0 = arith.constant 0 : index
    %c0_0 = arith.constant 0 : index
    %0 = vector.load %arg1[%c0, %c0_0] : memref<8x32xf32, #tpu.memory_space<vmem>>, vector<8x32xf32>
    %1 = arith.truncf %0 : vector<8x32xf32> to vector<8x32xbf16>
    %c0_1 = arith.constant 0 : index
    %c0_2 = arith.constant 0 : index
    %2 = vector.load %arg2[%c0_1, %c0_2] : memref<8x32xf32, #tpu.memory_space<vmem>>, vector<8x32xf32>
    %3 = arith.truncf %2 : vector<8x32xf32> to vector<8x32xbf16>
    %c0_3 = arith.constant 0 : index
    %c0_4 = arith.constant 0 : index
    %4 = vector.load %arg3[%c0_3, %c0_4] : memref<32x128xbf16, #tpu.memory_space<vmem>>, vector<32x128xbf16>
    %cst = arith.constant dense<0.000000e+00> : vector<8x128xf32>
    %5 = tpu.matmul %1, %4, %cst {dimension_numbers = #tpu.dot_dimension_numbers<[1], [0], [0], [1], [0, 0, 1, 1], [], []>} : vector<8x32xbf16>, vector<32x128xbf16>, vector<8x128xf32> -> vector<8x128xf32>
    %c0_5 = arith.constant 0 : index
    %c0_6 = arith.constant 0 : index
    %6 = vector.load %arg4[%c0_5, %c0_6] : memref<32x128xbf16, #tpu.memory_space<vmem>>, vector<32x128xbf16>
    %cst_7 = arith.constant dense<0.000000e+00> : vector<8x128xf32>
    %7 = tpu.matmul %3, %6, %cst_7 {dimension_numbers = #tpu.dot_dimension_numbers<[1], [0], [0], [1], [0, 0, 1, 1], [], []>} : vector<8x32xbf16>, vector<32x128xbf16>, vector<8x128xf32> -> vector<8x128xf32>
    %8 = arith.addf %5, %7 : vector<8x128xf32>
    %c0_8 = arith.constant 0 : index
    %c0_9 = arith.constant 0 : index
    %9 = vector.load %arg5[%c0_8, %c0_9] : memref<1x128xf32, #tpu.memory_space<vmem>>, vector<1x128xf32>
    %10 = vector.broadcast %9 : vector<1x128xf32> to vector<8x128xf32>
    %11 = arith.addf %8, %10 : vector<8x128xf32>
    %cst_10 = arith.constant 0.000000e+00 : f32
    %12 = vector.broadcast %cst_10 : f32 to vector<8x128xf32>
    %13 = arith.maximumf %11, %12 : vector<8x128xf32>
    %14 = arith.truncf %13 : vector<8x128xf32> to vector<8x128xbf16>
    %c0_11 = arith.constant 0 : index
    %c0_12 = arith.constant 0 : index
    %15 = vector.load %arg6[%c0_11, %c0_12] : memref<128x128xbf16, #tpu.memory_space<vmem>>, vector<128x128xbf16>
    %cst_13 = arith.constant dense<0.000000e+00> : vector<8x128xf32>
    %16 = tpu.matmul %14, %15, %cst_13 {dimension_numbers = #tpu.dot_dimension_numbers<[1], [0], [0], [1], [0, 0, 1, 1], [], []>} : vector<8x128xbf16>, vector<128x128xbf16>, vector<8x128xf32> -> vector<8x128xf32>
    %c0_14 = arith.constant 0 : index
    %c0_15 = arith.constant 0 : index
    %17 = vector.load %arg7[%c0_14, %c0_15] : memref<1x128xf32, #tpu.memory_space<vmem>>, vector<1x128xf32>
    %18 = vector.broadcast %17 : vector<1x128xf32> to vector<8x128xf32>
    %19 = arith.addf %16, %18 : vector<8x128xf32>
    %cst_16 = arith.constant 0.000000e+00 : f32
    %20 = vector.broadcast %cst_16 : f32 to vector<8x128xf32>
    %21 = arith.maximumf %19, %20 : vector<8x128xf32>
    %c0_17 = arith.constant 0 : index
    %c0_18 = arith.constant 0 : index
    %22 = vector.load %arg8[%c0_17, %c0_18] : memref<1x128xf32, #tpu.memory_space<vmem>>, vector<1x128xf32>
    %23 = vector.broadcast %22 : vector<1x128xf32> to vector<8x128xf32>
    %24 = arith.mulf %21, %23 : vector<8x128xf32>
    %cst_19 = arith.constant dense<0.000000e+00> : vector<8xf32>
    %25 = vector.multi_reduction <add>, %24, %cst_19 [1] : vector<8x128xf32> to vector<8xf32>
    %26 = vector.shape_cast %25 : vector<8xf32> to vector<8x1xf32>
    %c0_20 = arith.constant 0 : index
    %c0_21 = arith.constant 0 : index
    %27 = vector.load %arg9[%c0_20, %c0_21] : memref<1x1xf32, #tpu.memory_space<vmem>>, vector<1x1xf32>
    %28 = vector.broadcast %27 : vector<1x1xf32> to vector<8x1xf32>
    %29 = arith.addf %26, %28 : vector<8x1xf32>
    %c0_22 = arith.constant 0 : index
    %c0_23 = arith.constant 0 : index
    %30 = vector.load %arg10[%c0_22, %c0_23] : memref<8x1xf32, #tpu.memory_space<vmem>>, vector<8x1xf32>
    tpu.vector_store %arg10[%c0_22, %c0_23], %29 {strides = array<i32>} : memref<8x1xf32, #tpu.memory_space<vmem>>, vector<8x1xf32>,
    return
  }
  func.func @transform_0(%arg0: i32) -> (i32, i32) {
    %c0_i32 = arith.constant 0 : i32
    %c0_i32_0 = arith.constant 0 : i32
    return %arg0, %c0_i32 : i32, i32
  }
  func.func @transform_1(%arg0: i32) -> (i32, i32) {
    %c0_i32 = arith.constant 0 : i32
    %c0_i32_0 = arith.constant 0 : i32
    return %arg0, %c0_i32 : i32, i32
  }
  func.func @transform_2(%arg0: i32) -> (i32, i32) {
    %c0_i32 = arith.constant 0 : i32
    %c0_i32_0 = arith.constant 0 : i32
    %c0_i32_1 = arith.constant 0 : i32
    return %c0_i32, %c0_i32_0 : i32, i32
  }
  func.func @transform_3(%arg0: i32) -> (i32, i32) {
    %c0_i32 = arith.constant 0 : i32
    %c0_i32_0 = arith.constant 0 : i32
    %c0_i32_1 = arith.constant 0 : i32
    return %c0_i32, %c0_i32_0 : i32, i32
  }
  func.func @transform_4(%arg0: i32) -> (i32, i32) {
    %c0_i32 = arith.constant 0 : i32
    %c0_i32_0 = arith.constant 0 : i32
    %c0_i32_1 = arith.constant 0 : i32
    return %c0_i32, %c0_i32_0 : i32, i32
  }
  func.func @transform_5(%arg0: i32) -> (i32, i32) {
    %c0_i32 = arith.constant 0 : i32
    %c0_i32_0 = arith.constant 0 : i32
    %c0_i32_1 = arith.constant 0 : i32
    return %c0_i32, %c0_i32_0 : i32, i32
  }
  func.func @transform_6(%arg0: i32) -> (i32, i32) {
    %c0_i32 = arith.constant 0 : i32
    %c0_i32_0 = arith.constant 0 : i32
    %c0_i32_1 = arith.constant 0 : i32
    return %c0_i32, %c0_i32_0 : i32, i32
  }
  func.func @transform_7(%arg0: i32) -> (i32, i32) {
    %c0_i32 = arith.constant 0 : i32
    %c0_i32_0 = arith.constant 0 : i32
    %c0_i32_1 = arith.constant 0 : i32
    return %c0_i32, %c0_i32_0 : i32, i32
  }
  func.func @transform_8(%arg0: i32) -> (i32, i32) {
    %c0_i32 = arith.constant 0 : i32
    %c0_i32_0 = arith.constant 0 : i32
    %c0_i32_1 = arith.constant 0 : i32
    return %c0_i32, %c0_i32_0 : i32, i32
  }
  func.func @transform_9(%arg0: i32) -> (i32, i32) {
    %c0_i32 = arith.constant 0 : i32
    %c0_i32_0 = arith.constant 0 : i32
    return %arg0, %c0_i32 : i32, i32
  }
}

</mosaic_0001>

<llo_original>
// kernel: tpu_custom_call.1
$region0: #{tpu_custom_call.1}
  #allocation0 [shape = 'u32[]', space=smem, size = 0x4, offset = 0x4, fixed_abs, tag = 'smem constant byte address 0x4 - core index']
  #allocation1 [shape = 'u32[144,128]{1,0:T(1,128)}', space=vmem, size = 0x12000, scoped, tag = 'internal scratch']
  #allocation2 [shape = 'f32[1,1]{1,0:T(1,128)S(1)}', space=vmem, size = 0x200, scoped, tag = 'scoped memory for tpu_custom_call.1']
  %s0 = inlined_call_operand.hbm [shape: f32[8,32], index: 0, kind: input, shape index: {}]
  %s1 = inlined_call_operand.hbm [shape: f32[8,32], index: 1, kind: input, shape index: {}]
  %s2 = inlined_call_operand.hbm [shape: bf16[32,128], index: 2, kind: input, shape index: {}]
  %s3 = inlined_call_operand.hbm [shape: bf16[32,128], index: 3, kind: input, shape index: {}]
  %s4 = inlined_call_operand.vmem [shape: f32[1,128], index: 4, kind: input, shape index: {}]
  %s5 = inlined_call_operand.hbm [shape: bf16[128,128], index: 5, kind: input, shape index: {}]
  %s6 = inlined_call_operand.vmem [shape: f32[1,128], index: 6, kind: input, shape index: {}]
  %s7 = inlined_call_operand.vmem [shape: f32[1,128], index: 7, kind: input, shape index: {}]
  %s8 = inlined_call_operand.<no memory space> [shape: f32[1,1], index: 8, kind: input, shape index: {}]
  %s9 = inlined_call_operand.vmem [shape: f32[8,1], index: 9, kind: output, shape index: {}]
  %s10 = sld [smem:[#allocation0]]
  $region66: #{tpu_custom_call.1} parent=0
    _
  %s12 = ssub.s32 1, %s10
  %s13 = scalar_select 0, %s12, %s10
  %v14 = vstv %s8
  %15 = vst [vmem:[#allocation2] sm:$0x1] %v14
  $region1: #{tpu_custom_call.1} parent=0
    #allocation3 [shape = 'u8[4096]{0}', space=vmem, size = 0x1000, scoped, tag = 'input window, operand 0, single buffered']
    #allocation4 [shape = 's32[1]{0}', space=sflag, size = 0x4, scoped, tag = 'scoped memory for tpu_custom_call.1']
    #allocation5 [shape = 'u8[4096]{0}', space=vmem, size = 0x1000, scoped, tag = 'input window, operand 1, single buffered']
    #allocation6 [shape = 's32[1]{0}', space=sflag, size = 0x4, scoped, tag = 'scoped memory for tpu_custom_call.1']
    #allocation7 [shape = 'u8[8192]{0}', space=vmem, size = 0x2000, scoped, tag = 'input window, operand 2, single buffered']
    #allocation8 [shape = 'u8[8192]{0}', space=vmem, size = 0x2000, scoped, tag = 'input window, operand 3, single buffered']
    #allocation9 [shape = 's32[1]{0}', space=sflag, size = 0x4, scoped, tag = 'scoped memory for tpu_custom_call.1']
    #allocation10 [shape = 'u8[32768]{0}', space=vmem, size = 0x8000, scoped, tag = 'input window, operand 5, single buffered']
    %16 = vsyncpa [#allocation4], 0
    %17 = vsyncpa [#allocation6], 0
    %18 = vsyncpa [#allocation9], 0
    // Predicated region
    $region2: #{tpu_custom_call.1} parent=1 // pred_check
      _
    $region3: #{tpu_custom_call.1} parent=1 // pred_check_branch
      %20 = sbr.rel (0) target = $region5
    $region4: #{tpu_custom_call.1} parent=1 // pred_region
      %s22 = ssub.s32 128, 128
      %23 = vsyncadd [#allocation4], %s22
      %s25 = sshll.u32 [#allocation3], 4
      %s26 = int_to_ptr.vmem [resolvable:$true] %s25
      %28 = dma.hbm_to_vmem [thread:$0]  %s0, 128, %s26, [#allocation4]
    $region5: #{tpu_custom_call.1} parent=1 // pred_fallthru
      _
    // Predicated region
    $region6: #{tpu_custom_call.1} parent=1 // pred_check
      _
    $region7: #{tpu_custom_call.1} parent=1 // pred_check_branch
      %30 = sbr.rel (0) target = $region9
    $region8: #{tpu_custom_call.1} parent=1 // pred_region
      %s32 = ssub.s32 128, 128
      %33 = vsyncadd [#allocation6], %s32
      %s35 = sshll.u32 [#allocation5], 4
      %s36 = int_to_ptr.vmem [resolvable:$true] %s35
      %38 = dma.hbm_to_vmem [thread:$0]  %s1, 128, %s36, [#allocation6]
    $region9: #{tpu_custom_call.1} parent=1 // pred_fallthru
      _
    // Predicated region
    $region10: #{tpu_custom_call.1} parent=1 // pred_check
      _
    $region11: #{tpu_custom_call.1} parent=1 // pred_check_branch
      %40 = sbr.rel (0) target = $region13
    $region12: #{tpu_custom_call.1} parent=1 // pred_region
      %s42 = ssub.s32 256, 256
      %43 = vsyncadd [#allocation6], %s42
      %s44 = sshll.u32 [#allocation7], 4
      %s45 = int_to_ptr.vmem [resolvable:$true] %s44
      %50 = dma.hbm_to_vmem [thread:$0]  %s2, 256, %s45, [#allocation6], 64, 64, 4
    $region13: #{tpu_custom_call.1} parent=1 // pred_fallthru
      _
    // Predicated region
    $region14: #{tpu_custom_call.1} parent=1 // pred_check
      _
    $region15: #{tpu_custom_call.1} parent=1 // pred_check_branch
      %52 = sbr.rel (0) target = $region17
    $region16: #{tpu_custom_call.1} parent=1 // pred_region
      %s54 = ssub.s32 256, 256
      %55 = vsyncadd [#allocation9], %s54
      %s56 = sshll.u32 [#allocation8], 4
      %s57 = int_to_ptr.vmem [resolvable:$true] %s56
      %62 = dma.hbm_to_vmem [thread:$0]  %s3, 256, %s57, [#allocation9], 64, 64, 4
    $region17: #{tpu_custom_call.1} parent=1 // pred_fallthru
      _
    // Predicated region
    $region18: #{tpu_custom_call.1} parent=1 // pred_check
      _
    $region19: #{tpu_custom_call.1} parent=1 // pred_check_branch
      %64 = sbr.rel (0) target = $region21
    $region20: #{tpu_custom_call.1} parent=1 // pred_region
      _
    $region21: #{tpu_custom_call.1} parent=1 // pred_fallthru
      _
    // Predicated region
    $region22: #{tpu_custom_call.1} parent=1 // pred_check
      _
    $region23: #{tpu_custom_call.1} parent=1 // pred_check_branch
      %66 = sbr.rel (0) target = $region25
    $region24: #{tpu_custom_call.1} parent=1 // pred_region
      %s68 = ssub.s32 1024, 1024
      %69 = vsyncadd [#allocation9], %s68
      %s70 = sshll.u32 [#allocation10], 4
      %s71 = int_to_ptr.vmem [resolvable:$true] %s70
      %76 = dma.hbm_to_vmem [thread:$0]  %s5, 1024, %s71, [#allocation9], 64, 64, 4
    $region25: #{tpu_custom_call.1} parent=1 // pred_fallthru
      _
    // Predicated region
    $region26: #{tpu_custom_call.1} parent=1 // pred_check
      _
    $region27: #{tpu_custom_call.1} parent=1 // pred_check_branch
      %78 = sbr.rel (0) target = $region29
    $region28: #{tpu_custom_call.1} parent=1 // pred_region
      _
    $region29: #{tpu_custom_call.1} parent=1 // pred_fallthru
      _
    // Predicated region
    $region30: #{tpu_custom_call.1} parent=1 // pred_check
      _
    $region31: #{tpu_custom_call.1} parent=1 // pred_check_branch
      %80 = sbr.rel (0) target = $region33
    $region32: #{tpu_custom_call.1} parent=1 // pred_region
      _
    $region33: #{tpu_custom_call.1} parent=1 // pred_fallthru
      _
    // Predicated region
    $region34: #{tpu_custom_call.1} parent=1 // pred_check
      _
    $region35: #{tpu_custom_call.1} parent=1 // pred_check_branch
      %82 = sbr.rel (0) target = $region37
    $region36: #{tpu_custom_call.1} parent=1 // pred_region
      _
    $region37: #{tpu_custom_call.1} parent=1 // pred_fallthru
      _
    // Predicated region
    $region38: #{tpu_custom_call.1} parent=1 // pred_check
      _
    $region39: #{tpu_custom_call.1} parent=1 // pred_check_branch
      %84 = sbr.rel (0) target = $region41
    $region40: #{tpu_custom_call.1} parent=1 // pred_region
      %85 = dma.done [#allocation4], 128
    $region41: #{tpu_custom_call.1} parent=1 // pred_fallthru
      _
    // Predicated region
    $region42: #{tpu_custom_call.1} parent=1 // pred_check
      _
    $region43: #{tpu_custom_call.1} parent=1 // pred_check_branch
      %87 = sbr.rel (0) target = $region45
    $region44: #{tpu_custom_call.1} parent=1 // pred_region
      %88 = dma.done [#allocation6], 128
    $region45: #{tpu_custom_call.1} parent=1 // pred_fallthru
      _
    // Predicated region
    $region46: #{tpu_custom_call.1} parent=1 // pred_check
      _
    $region47: #{tpu_custom_call.1} parent=1 // pred_check_branch
      %90 = sbr.rel (0) target = $region49
    $region48: #{tpu_custom_call.1} parent=1 // pred_region
      %91 = dma.done [#allocation6], 256
    $region49: #{tpu_custom_call.1} parent=1 // pred_fallthru
      _
    // Predicated region
    $region50: #{tpu_custom_call.1} parent=1 // pred_check
      _
    $region51: #{tpu_custom_call.1} parent=1 // pred_check_branch
      %93 = sbr.rel (0) target = $region53
    $region52: #{tpu_custom_call.1} parent=1 // pred_region
      %94 = dma.done [#allocation9], 256
    $region53: #{tpu_custom_call.1} parent=1 // pred_fallthru
      _
    // Predicated region
    $region54: #{tpu_custom_call.1} parent=1 // pred_check
      _
    $region55: #{tpu_custom_call.1} parent=1 // pred_check_branch
      %96 = sbr.rel (0) target = $region57
    $region56: #{tpu_custom_call.1} parent=1 // pred_region
      %97 = dma.done [#allocation9], 1024
    $region57: #{tpu_custom_call.1} parent=1 // pred_fallthru
      _
    %v99 = vld [vmem:[#allocation3] sm:$0xff]
    %v100 = vpack.c.bf16 %v99, %v99
    %v101 = vld [vmem:[#allocation5] sm:$0xff]
    %v102 = vpack.c.bf16 %v101, %v101
    %v103 = vld [vmem:[#allocation7] sm:$0xf]
    %v104 = vld [vmem:[#allocation7 + $0x4] sm:$0xf]
    %v105 = vld [vmem:[#allocation7 + $0x8] sm:$0xf]
    %v106 = vld [vmem:[#allocation7 + $0xc] sm:$0xf]
    %v107 = vld [vmem:[#allocation8] sm:$0xf]
    %v108 = vld [vmem:[#allocation8 + $0x4] sm:$0xf]
    %v109 = vld [vmem:[#allocation8 + $0x8] sm:$0xf]
    %v110 = vld [vmem:[#allocation8 + $0xc] sm:$0xf]
    %v115 = vunpack.c.l.b16 %v107
    %v116 = vunpack.c.l.b16 %v108
    %v117 = vunpack.c.l.b16 %v109
    %v118 = vunpack.c.l.b16 %v110
    %v119 = vpack.c.b16 %v116, %v115
    %v120 = vpack.c.b16 %v118, %v117
    %vm123 = vcmask 261120
    %v125 = vsel %vm123, %v102, 0
    %127 = vmatprep.subr.bf16.mxu0 0
    %128 = vmatpush1.bf16.msra.mxu0 %v119
    %129 = vmatprep.subr.bf16.mxu0 0
    %130 = vmatpush1.bf16.msra.mxu0 %v120
    %131 = vmatprep.subr.bf16.mxu0 0
    %132 = vmatpush1.bf16.msra.mxu0 0
    %133 = vmatprep.subr.bf16.mxu0 0
    %134 = vmatpush1.bf16.msra.mxu0 0
    %135 = vmatprep.subr.bf16.mxu0 0
    %136 = vmatpush1.bf16.msra.mxu0 0
    %137 = vmatprep.subr.bf16.mxu0 0
    %138 = vmatpush1.bf16.msra.mxu0 0
    %139 = vmatprep.subr.bf16.mxu0 0
    %140 = vmatpush1.bf16.msra.mxu0 0
    %141 = vmatprep.subr.bf16.mxu0 0
    %142 = vmatpush1.bf16.msra.mxu0 0
    %143 = vmatprep.subr.bf16.mxu0 0
    %144 = vmatpush1.bf16.msra.mxu0 0
    %145 = vmatprep.subr.bf16.mxu0 0
    %146 = vmatpush1.bf16.msra.mxu0 0
    %147 = vmatprep.subr.bf16.mxu0 0
    %148 = vmatpush1.bf16.msra.mxu0 0
    %149 = vmatprep.subr.bf16.mxu0 0
    %150 = vmatpush1.bf16.msra.mxu0 0
    %151 = vmatprep.subr.bf16.mxu0 0
    %152 = vmatpush1.bf16.msra.mxu0 0
    %153 = vmatprep.subr.bf16.mxu0 0
    %154 = vmatpush1.bf16.msra.mxu0 0
    %155 = vmatprep.subr.bf16.mxu0 0
    %156 = vmatpush1.bf16.msra.mxu0 0
    %157 = vmatprep.subr.bf16.mxu0 0
    %158 = vmatpush1.bf16.msra.mxu0 0
    %159 = vmatprep.mubr.bf16.mxu0 0
    %160 = vmatmul.mubr.bf16.gmra.mrb[0].mxu0 %v125
    %v161 = vpop.f32.mrb[0].mxu0
    %v162 = vadd.f32 0.0, %v161
    %v163 = vpop.f32.mrb[0].mxu0
    %v164 = vpop.f32.mrb[0].mxu0
    %v165 = vpop.f32.mrb[0].mxu0
    %166 = vdwg.mxu0
    %v171 = vunpack.c.l.b16 %v103
    %v172 = vunpack.c.l.b16 %v104
    %v173 = vunpack.c.l.b16 %v105
    %v174 = vunpack.c.l.b16 %v106
    %v175 = vpack.c.b16 %v172, %v171
    %v176 = vpack.c.b16 %v174, %v173
    %v180 = vsel %vm123, %v100, 0
    %182 = vmatprep.subr.bf16.mxu0 0
    %183 = vmatpush1.bf16.msra.mxu0 %v175
    %184 = vmatprep.subr.bf16.mxu0 0
    %185 = vmatpush1.bf16.msra.mxu0 %v176
    %186 = vmatprep.subr.bf16.mxu0 0
    %187 = vmatpush1.bf16.msra.mxu0 0
    %188 = vmatprep.subr.bf16.mxu0 0
    %189 = vmatpush1.bf16.msra.mxu0 0
    %190 = vmatprep.subr.bf16.mxu0 0
    %191 = vmatpush1.bf16.msra.mxu0 0
    %192 = vmatprep.subr.bf16.mxu0 0
    %193 = vmatpush1.bf16.msra.mxu0 0
    %194 = vmatprep.subr.bf16.mxu0 0
    %195 = vmatpush1.bf16.msra.mxu0 0
    %196 = vmatprep.subr.bf16.mxu0 0
    %197 = vmatpush1.bf16.msra.mxu0 0
    %198 = vmatprep.subr.bf16.mxu0 0
    %199 = vmatpush1.bf16.msra.mxu0 0
    %200 = vmatprep.subr.bf16.mxu0 0
    %201 = vmatpush1.bf16.msra.mxu0 0
    %202 = vmatprep.subr.bf16.mxu0 0
    %203 = vmatpush1.bf16.msra.mxu0 0
    %204 = vmatprep.subr.bf16.mxu0 0
    %205 = vmatpush1.bf16.msra.mxu0 0
    %206 = vmatprep.subr.bf16.mxu0 0
    %207 = vmatpush1.bf16.msra.mxu0 0
    %208 = vmatprep.subr.bf16.mxu0 0
    %209 = vmatpush1.bf16.msra.mxu0 0
    %210 = vmatprep.subr.bf16.mxu0 0
    %211 = vmatpush1.bf16.msra.mxu0 0
    %212 = vmatprep.subr.bf16.mxu0 0
    %213 = vmatpush1.bf16.msra.mxu0 0
    %214 = vmatprep.mubr.bf16.mxu0 0
    %215 = vmatmul.mubr.bf16.gmra.mrb[0].mxu0 %v180
    %v216 = vpop.f32.mrb[0].mxu0
    %v217 = vadd.f32 %v162, %v216
    %v218 = vpop.f32.mrb[0].mxu0
    %v219 = vpop.f32.mrb[0].mxu0
    %v220 = vpop.f32.mrb[0].mxu0
    %221 = vdwg.mxu0
    %v222 = vld [vmem:[%s4] sm:$0x1]
    %v224 = vlaneseq
    %v225 = vshrl.u32 %v224, 7
    %v226 = vsub.s32 0, %v225
    %v227 = vrot.slane %v222, %v226
    %v229 = vadd.f32 %v217, %v227
    %v230 = vmax.f32 %v229, 0.0
    %v231 = vpack.c.bf16 %v230, %v230
    %v232 = vld [vmem:[#allocation10] sm:$0xf]
    %v233 = vld [vmem:[#allocation10 + $0x4] sm:$0xf]
    %v234 = vld [vmem:[#allocation10 + $0x8] sm:$0xf]
    %v235 = vld [vmem:[#allocation10 + $0xc] sm:$0xf]
    %v236 = vld [vmem:[#allocation10 + $0x10] sm:$0xf]
    %v237 = vld [vmem:[#allocation10 + $0x14] sm:$0xf]
    %v238 = vld [vmem:[#allocation10 + $0x18] sm:$0xf]
    %v239 = vld [vmem:[#allocation10 + $0x1c] sm:$0xf]
    %v240 = vld [vmem:[#allocation10 + $0x20] sm:$0xf]
    %v241 = vld [vmem:[#allocation10 + $0x24] sm:$0xf]
    %v242 = vld [vmem:[#allocation10 + $0x28] sm:$0xf]
    %v243 = vld [vmem:[#allocation10 + $0x2c] sm:$0xf]
    %v244 = vld [vmem:[#allocation10 + $0x30] sm:$0xf]
    %v245 = vld [vmem:[#allocation10 + $0x34] sm:$0xf]
    %v246 = vld [vmem:[#allocation10 + $0x38] sm:$0xf]
    %v247 = vld [vmem:[#allocation10 + $0x3c] sm:$0xf]
    %v248 = vld [vmem:[%s6] sm:$0x1]
    %v250 = vlaneseq
    %v251 = vshrl.u32 %v250, 7
    %v252 = vsub.s32 0, %v251
    %v253 = vrot.slane %v248, %v252
    %v271 = vunpack.c.l.b16 %v232
    %v272 = vunpack.c.l.b16 %v233
    %v273 = vunpack.c.l.b16 %v234
    %v274 = vunpack.c.l.b16 %v235
    %v275 = vunpack.c.l.b16 %v236
    %v276 = vunpack.c.l.b16 %v237
    %v277 = vunpack.c.l.b16 %v238
    %v278 = vunpack.c.l.b16 %v239
    %v279 = vunpack.c.l.b16 %v240
    %v280 = vunpack.c.l.b16 %v241
    %v281 = vunpack.c.l.b16 %v242
    %v282 = vunpack.c.l.b16 %v243
    %v283 = vunpack.c.l.b16 %v244
    %v284 = vunpack.c.l.b16 %v245
    %v285 = vunpack.c.l.b16 %v246
    %v286 = vunpack.c.l.b16 %v247
    %v287 = vpack.c.b16 %v272, %v271
    %v288 = vpack.c.b16 %v274, %v273
    %v289 = vpack.c.b16 %v276, %v275
    %v290 = vpack.c.b16 %v278, %v277
    %v291 = vpack.c.b16 %v280, %v279
    %v292 = vpack.c.b16 %v282, %v281
    %v293 = vpack.c.b16 %v284, %v283
    %v294 = vpack.c.b16 %v286, %v285
    %303 = vmatprep.subr.bf16.mxu0 0
    %304 = vmatpush1.bf16.msra.mxu0 %v287
    %305 = vmatprep.subr.bf16.mxu0 0
    %306 = vmatpush1.bf16.msra.mxu0 %v288
    %307 = vmatprep.subr.bf16.mxu0 0
    %308 = vmatpush1.bf16.msra.mxu0 %v289
    %309 = vmatprep.subr.bf16.mxu0 0
    %310 = vmatpush1.bf16.msra.mxu0 %v290
    %311 = vmatprep.subr.bf16.mxu0 0
    %312 = vmatpush1.bf16.msra.mxu0 %v291
    %313 = vmatprep.subr.bf16.mxu0 0
    %314 = vmatpush1.bf16.msra.mxu0 %v292
    %315 = vmatprep.subr.bf16.mxu0 0
    %316 = vmatpush1.bf16.msra.mxu0 %v293
    %317 = vmatprep.subr.bf16.mxu0 0
    %318 = vmatpush1.bf16.msra.mxu0 %v294
    %319 = vmatprep.subr.bf16.mxu0 0
    %320 = vmatpush1.bf16.msra.mxu0 0
    %321 = vmatprep.subr.bf16.mxu0 0
    %322 = vmatpush1.bf16.msra.mxu0 0
    %323 = vmatprep.subr.bf16.mxu0 0
    %324 = vmatpush1.bf16.msra.mxu0 0
    %325 = vmatprep.subr.bf16.mxu0 0
    %326 = vmatpush1.bf16.msra.mxu0 0
    %327 = vmatprep.subr.bf16.mxu0 0
    %328 = vmatpush1.bf16.msra.mxu0 0
    %329 = vmatprep.subr.bf16.mxu0 0
    %330 = vmatpush1.bf16.msra.mxu0 0
    %331 = vmatprep.subr.bf16.mxu0 0
    %332 = vmatpush1.bf16.msra.mxu0 0
    %333 = vmatprep.subr.bf16.mxu0 0
    %334 = vmatpush1.bf16.msra.mxu0 0
    %335 = vmatprep.mubr.bf16.mxu0 0
    %336 = vmatmul.mubr.bf16.gmra.mrb[0].mxu0 %v231
    %v337 = vpop.f32.mrb[0].mxu0
    %v338 = vadd.f32 %v253, %v337
    %v339 = vpop.f32.mrb[0].mxu0
    %v340 = vpop.f32.mrb[0].mxu0
    %v341 = vpop.f32.mrb[0].mxu0
    %342 = vdwg.mxu0
    %v343 = vmax.f32 %v338, 0.0
    %v344 = vld [vmem:[%s7] sm:$0x1]
    %v346 = vlaneseq
    %v347 = vshrl.u32 %v346, 7
    %v348 = vsub.s32 0, %v347
    %v349 = vrot.slane %v344, %v348
    %v351 = vmul.f32 %v343, %v349
    %352 = vadd.xlane.f32.xlu0 %v351
    %v353 = vpop.xlane.xlu0 %352
    %v354 = vld [vmem:[#allocation2] sm:$0x1]
    %v356 = vlaneseq
    %v357 = vshrl.u32 %v356, 7
    %v358 = vsub.s32 0, %v357
    %v359 = vrot.slane %v354, %v358
    %v361 = vadd.f32 %v353, %v359
    %vm362 = vcmask 7168
    %363 = vst.msk [vmem:[%s9] sm:$0xff] %vm362, %v361
    // Predicated region
    $region58: #{tpu_custom_call.1} parent=1 // pred_check
      _
    $region59: #{tpu_custom_call.1} parent=1 // pred_check_branch
      %365 = sbr.rel (0) target = $region61
    $region60: #{tpu_custom_call.1} parent=1 // pred_region
      _
    $region61: #{tpu_custom_call.1} parent=1 // pred_fallthru
      _
    // Predicated region
    $region62: #{tpu_custom_call.1} parent=1 // pred_check
      _
    $region63: #{tpu_custom_call.1} parent=1 // pred_check_branch
      %367 = sbr.rel (0) target = $region65
    $region64: #{tpu_custom_call.1} parent=1 // pred_region
      _
    $region65: #{tpu_custom_call.1} parent=1 // pred_fallthru
      _
    %368 = vsyncpa [#allocation4], 1
    %369 = vsyncpa [#allocation6], 1
    %370 = vsyncpa [#allocation9], 1

</llo_original>
